<compile_context>
chip_gen: v5e
topology: v5e:2x2
jax: 0.10.0
libtpu: 0.0.40
codegen_flags: <defaults>
</compile_context>

<pallas_src>
import functools

import jax
import jax.numpy as jnp
from jax.experimental import pallas as pl
from jax.experimental.pallas import tpu as pltpu

IMG_SIZE = 16          # cfg.model.ldmk.img_size (small for this synthetic test)
HIDDEN = 8             # hidden channels of the synthetic backbone
NUM_LDMK = 8           # number of landmarks
MEAN = (0.485, 0.456, 0.406)
STD = (0.229, 0.224, 0.225)


def _ldmk_kernel(patches_ref, w1_ref, w2_ref, coeffs_ref, out_ref):
    """Lane-major heatmap head: fused (conv+bias) matmul -> ReLU -> 1x1 conv ->
    spatial softmax -> soft-argmax moments on the MXU (coords pre-scaled to
    original-image pixels)."""
    # 3x3 conv (+ folded ToTensor/Normalize + folded bias via ones row) as a
    # single matmul: (HIDDEN, 28) @ (28, H*W) -> (HIDDEN, H*W); lanes = spatial.
    hfeat = jnp.maximum(
        jnp.dot(w1_ref[...], patches_ref[...],
                preferred_element_type=jnp.float32), 0.0)

    # 1x1 conv -> per-landmark heatmap logits, (K, H*W). b2 omitted: the
    # spatial softmax is invariant to a per-landmark constant bias.
    logits = jnp.dot(w2_ref[...], hfeat, preferred_element_type=jnp.float32)

    # Numerically stable spatial softmax numerators.
    m = jnp.max(logits, axis=-1, keepdims=True)                 # (K, 1)  XLU
    e = jnp.exp(logits - m)                                     # (K, H*W) EUP

    # Soft-argmax moments in ONE MXU matmul:
    #   coeffs columns = [ones, x*(w/size), y*(h/size)]  ->  (K, 3)
    moments = jnp.dot(e, coeffs_ref[...], preferred_element_type=jnp.float32)
    inv = pl.reciprocal(moments[:, 0:1], approx=True)           # 1/denom, EUP
    out_ref[...] = moments[:, 1:3] * inv                        # (K, 2)


@functools.partial(jax.jit, static_argnames=("orig_h", "orig_w"))
def ldmk_detector_forward(img_bgr_u8, params, orig_h, orig_w):
    """Reproduces ldmkDetector.forward for a single HWC BGR uint8 image."""
    size = IMG_SIZE
    w1, b1, w2 = params

    # ---- preprocessing glue (BGR->RGB, resize) as plain XLA ----
    # TODO(synk): jax.image.resize(bilinear) is not bit-identical to
    # torchvision/PIL Resize (antialias + half-pixel alignment differ).
    img_rgb = img_bgr_u8[:, :, ::-1].astype(jnp.float32)
    resized = jax.image.resize(img_rgb, (size, size, 3), method="bilinear")

    mean = jnp.asarray(MEAN, jnp.float32)
    std = jnp.asarray(STD, jnp.float32)

    # Fold ToTensor(/255) + Normalize(mean,std) into the conv:
    #   w1f = w1 / (255*std)      (per input channel)
    #   b1f = b1 - sum_taps w1 . (mean/std)
    # Pad the raw image with 255*mean so padded taps contribute exactly 0
    # after folding (== zero padding of the normalized image, as nn.Conv2d).
    w1f = (w1 / (255.0 * std).reshape(1, 3, 1, 1)).reshape(HIDDEN, 27)
    b1f = (b1 - jnp.einsum("hcyx,c->h", w1, mean / std)).reshape(HIDDEN, 1)
    # Fold the bias in as an extra column matched to a row of ones in patches.
    w1aug = jnp.concatenate([w1f, b1f], axis=1)                 # (HIDDEN, 28)

    xpad = jnp.broadcast_to((255.0 * mean).reshape(1, 1, 3),
                            (size + 2, size + 2, 3))
    xpad = xpad.at[1:-1, 1:-1, :].set(resized)

    # im2col slab built once host-side; row index = c*9 + dy*3 + dx (matches
    # the w1 -> (HIDDEN, 27) reshape order), plus a trailing ones row for bias.
    rows = [xpad[dy:dy + size, dx:dx + size, c].reshape(-1)
            for c in range(3) for dy in range(3) for dx in range(3)]
    rows.append(jnp.ones((size * size,), jnp.float32))
    patches = jnp.stack(rows, axis=0)                           # (28, H*W)

    # Soft-argmax coefficient matrix [1, x, y] per pixel with the
    # resized->original rescale folded in:
    #   landmarks / [size/w, size/h] == landmarks * [w/size, h/size].
    col = jnp.tile(jnp.arange(size, dtype=jnp.float32), size)     # p % size
    row = jnp.repeat(jnp.arange(size, dtype=jnp.float32), size)   # p // size
    coeffs = jnp.stack([jnp.ones_like(col),
                        col * (orig_w / size),
                        row * (orig_h / size)], axis=1)          # (H*W, 3)

    args = (patches, w1aug, w2, coeffs)
    lm = pl.pallas_call(
        _ldmk_kernel,
        out_shape=jax.ShapeDtypeStruct((NUM_LDMK, 2), jnp.float32),
        in_specs=[pl.BlockSpec(memory_space=pltpu.MemorySpace.VMEM)
                  for _ in args],
        out_specs=pl.BlockSpec(memory_space=pltpu.MemorySpace.VMEM),
    )(*args)

    # module returns a (1, K, 2) array (numpy on host in the original)
    return lm.reshape(1, NUM_LDMK, 2)


def init_params(key):
    k1, k2 = jax.random.split(key, 2)
    # PyTorch Conv2d layout: (out_ch, in_ch, kh, kw)
    w1 = 0.1 * jax.random.normal(k1, (HIDDEN, 3, 3, 3), jnp.float32)
    b1 = jnp.zeros((HIDDEN,), jnp.float32)
    w2 = 0.1 * jax.random.normal(k2, (NUM_LDMK, HIDDEN), jnp.float32)
    return w1, b1, w2


if __name__ == "__main__":
    key = jax.random.PRNGKey(0)
    k_img, k_par = jax.random.split(key)

    # small synthetic HWC BGR "uint8" image (h != w to exercise anisotropic rescale)
    h, w = 32, 24
    img = jax.random.randint(k_img, (h, w, 3), 0, 256,
                             dtype=jnp.int32).astype(jnp.uint8)

    params = init_params(k_par)

    landmarks = ldmk_detector_forward(img, params, h, w)
    landmarks = jax.block_until_ready(landmarks)

    assert landmarks.shape == (1, NUM_LDMK, 2)
    assert bool(jnp.all(jnp.isfinite(landmarks)))
    print("KERNEL_OK")
</pallas_src>

<mosaic_0001>
module attributes {stable_mosaic.version = 11 : i64} {
  func.func @_ldmk_kernel(%arg0: memref<28x256xf32, #tpu.memory_space<vmem>>, %arg1: memref<8x28xf32, #tpu.memory_space<vmem>>, %arg2: memref<8x8xf32, #tpu.memory_space<vmem>>, %arg3: memref<256x3xf32, #tpu.memory_space<vmem>>, %arg4: memref<8x2xf32, #tpu.memory_space<vmem>>) attributes {dimension_semantics = [], scalar_prefetch = 0 : i64, scratch_operands = 0 : i64, tpu.core_type = #tpu.core_type<tc>} {
    %c0 = arith.constant 0 : index
    %c0_0 = arith.constant 0 : index
    %0 = vector.load %arg1[%c0, %c0_0] : memref<8x28xf32, #tpu.memory_space<vmem>>, vector<8x28xf32>
    %c0_1 = arith.constant 0 : index
    %c0_2 = arith.constant 0 : index
    %1 = vector.load %arg0[%c0_1, %c0_2] : memref<28x256xf32, #tpu.memory_space<vmem>>, vector<28x256xf32>
    %cst = arith.constant dense<0.000000e+00> : vector<8x256xf32>
    %2 = tpu.matmul %0, %1, %cst {dimension_numbers = #tpu.dot_dimension_numbers<[1], [0], [0], [1], [0, 0, 1, 1], [], []>} : vector<8x28xf32>, vector<28x256xf32>, vector<8x256xf32> -> vector<8x256xf32>
    %cst_3 = arith.constant 0.000000e+00 : f32
    %3 = vector.broadcast %cst_3 : f32 to vector<8x256xf32>
    %4 = arith.maximumf %2, %3 : vector<8x256xf32>
    %c0_4 = arith.constant 0 : index
    %c0_5 = arith.constant 0 : index
    %5 = vector.load %arg2[%c0_4, %c0_5] : memref<8x8xf32, #tpu.memory_space<vmem>>, vector<8x8xf32>
    %cst_6 = arith.constant dense<0.000000e+00> : vector<8x256xf32>
    %6 = tpu.matmul %5, %4, %cst_6 {dimension_numbers = #tpu.dot_dimension_numbers<[1], [0], [0], [1], [0, 0, 1, 1], [], []>} : vector<8x8xf32>, vector<8x256xf32>, vector<8x256xf32> -> vector<8x256xf32>
    %cst_7 = arith.constant dense<0xFF800000> : vector<8xf32>
    %7 = vector.multi_reduction <maximumf>, %6, %cst_7 [1] : vector<8x256xf32> to vector<8xf32>
    %8 = vector.shape_cast %7 : vector<8xf32> to vector<8x1xf32>
    %9 = vector.broadcast %8 : vector<8x1xf32> to vector<8x256xf32>
    %10 = arith.subf %6, %9 : vector<8x256xf32>
    %11 = math.exp %10 : vector<8x256xf32>
    %c0_8 = arith.constant 0 : index
    %c0_9 = arith.constant 0 : index
    %12 = vector.load %arg3[%c0_8, %c0_9] : memref<256x3xf32, #tpu.memory_space<vmem>>, vector<256x3xf32>
    %cst_10 = arith.constant dense<0.000000e+00> : vector<8x3xf32>
    %13 = tpu.matmul %11, %12, %cst_10 {dimension_numbers = #tpu.dot_dimension_numbers<[1], [0], [0], [1], [0, 0, 1, 1], [], []>} : vector<8x256xf32>, vector<256x3xf32>, vector<8x3xf32> -> vector<8x3xf32>
    %14 = vector.extract_strided_slice %13 {offsets = [0, 0], sizes = [8, 1], strides = [1, 1]} : vector<8x3xf32> to vector<8x1xf32>
    %15 = tpu.reciprocal %14 {approx = true} : vector<8x1xf32> -> vector<8x1xf32>
    %16 = vector.extract_strided_slice %13 {offsets = [0, 1], sizes = [8, 2], strides = [1, 1]} : vector<8x3xf32> to vector<8x2xf32>
    %17 = vector.broadcast %15 : vector<8x1xf32> to vector<8x2xf32>
    %18 = arith.mulf %16, %17 : vector<8x2xf32>
    %c0_11 = arith.constant 0 : index
    %c0_12 = arith.constant 0 : index
    %19 = vector.load %arg4[%c0_11, %c0_12] : memref<8x2xf32, #tpu.memory_space<vmem>>, vector<8x2xf32>
    tpu.vector_store %arg4[%c0_11, %c0_12], %18 {strides = array<i32>} : memref<8x2xf32, #tpu.memory_space<vmem>>, vector<8x2xf32>,
    return
  }
}

</mosaic_0001>

<llo_original>
// kernel: squeeze.35
$region0: #{squeeze.35}
  %s0 = inlined_call_operand.vmem [shape: f32[16,16,1], index: 0, kind: input, shape index: {}]
  %s1 = inlined_call_operand.vmem [shape: f32[1,256], index: 1, kind: output, shape index: {}]
  $region1: #{squeeze.35} parent=0
    #allocation0 [shape = 'u8[8192]{0}', space=vmem, size = 0x2000, scoped, tag = 'scoped mem for output reshape']
    %s2 = smov 3
    %v3 = vld [vmem:[%s0] ss:$8 sm:%s2]
    %vm4 = vcmask 130048
    %5 = vst.msk [vmem:[#allocation0] ss:$8 sm:$0x3] %vm4, %v3
    %s6 = scalar_lea.vmem %s0, 7
    %s7 = smov 3
    %v8 = vld [vmem:[%s6] ss:$8 sm:%s7]
    %9 = vrot.lane.b32.xlu0 %v8, 112
    %v10 = vpop.permute.xlu0 %9
    %vm11 = vcmask 1048448
    %12 = vst.msk [vmem:[#allocation0] ss:$8 sm:$0x3] %vm11, %v10
    %s13 = scalar_lea.vmem %s0, 6
    %s14 = smov 3
    %v15 = vld [vmem:[%s13] ss:$8 sm:%s14]
    %16 = vrot.lane.b32.xlu0 %v15, 96
    %v17 = vpop.permute.xlu0 %16
    %vm18 = vcmask 917248
    %19 = vst.msk [vmem:[#allocation0] ss:$8 sm:$0x3] %vm18, %v17
    %s20 = scalar_lea.vmem %s0, 5
    %s21 = smov 3
    %v22 = vld [vmem:[%s20] ss:$8 sm:%s21]
    %23 = vrot.lane.b32.xlu0 %v22, 80
    %v24 = vpop.permute.xlu0 %23
    %vm25 = vcmask 786048
    %26 = vst.msk [vmem:[#allocation0] ss:$8 sm:$0x3] %vm25, %v24
    %s27 = scalar_lea.vmem %s0, 4
    %s28 = smov 3
    %v29 = vld [vmem:[%s27] ss:$8 sm:%s28]
    %30 = vrot.lane.b32.xlu0 %v29, 64
    %v31 = vpop.permute.xlu0 %30
    %vm32 = vcmask 654848
    %33 = vst.msk [vmem:[#allocation0] ss:$8 sm:$0x3] %vm32, %v31
    %s34 = scalar_lea.vmem %s0, 3
    %s35 = smov 3
    %v36 = vld [vmem:[%s34] ss:$8 sm:%s35]
    %37 = vrot.lane.b32.xlu0 %v36, 48
    %v38 = vpop.permute.xlu0 %37
    %vm39 = vcmask 523648
    %40 = vst.msk [vmem:[#allocation0] ss:$8 sm:$0x3] %vm39, %v38
    %s41 = scalar_lea.vmem %s0, 2
    %s42 = smov 3
    %v43 = vld [vmem:[%s41] ss:$8 sm:%s42]
    %44 = vrot.lane.b32.xlu0 %v43, 32
    %v45 = vpop.permute.xlu0 %44
    %vm46 = vcmask 392448
    %47 = vst.msk [vmem:[#allocation0] ss:$8 sm:$0x3] %vm46, %v45
    %s48 = scalar_lea.vmem %s0, 1
    %s49 = smov 3
    %v50 = vld [vmem:[%s48] ss:$8 sm:%s49]
    %51 = vrot.lane.b32.xlu0 %v50, 16
    %v52 = vpop.permute.xlu0 %51
    %vm53 = vcmask 261248
    %54 = vst.msk [vmem:[#allocation0] ss:$8 sm:$0x3] %vm53, %v52
    %s56 = ssub.s32 2, 1
    %v57 = vld [vmem:[#allocation0] sm:%s56]
    %s59 = ssub.s32 2, 1
    %60 = vst [vmem:[%s1] sm:%s59] %v57
    %s61 = scalar_lea.vmem [#allocation0], 8
    %v62 = vld [vmem:[%s61] sm:%s56]
    %s64 = ssub.s32 2, 1
    %s65 = scalar_lea.vmem %s1, 1
    %66 = vst [vmem:[%s65] sm:%s64] %v62

// kernel: ldmk_detector_forward.1
$region0: #{ldmk_detector_forward.1}
  #allocation0 [shape = 'u32[]', space=smem, size = 0x4, offset = 0x4, fixed_abs, tag = 'smem constant byte address 0x4 - core index']
  #allocation1 [shape = 'u32[72,128]{1,0:T(1,128)}', space=vmem, size = 0x9000, scoped, tag = 'internal scratch']
  %s0 = inlined_call_operand.vmem [shape: f32[28,256], index: 0, kind: input, shape index: {}]
  %s1 = inlined_call_operand.vmem [shape: f32[8,28], index: 1, kind: input, shape index: {}]
  %s2 = inlined_call_operand.vmem [shape: f32[8,8], index: 2, kind: input, shape index: {}]
  %s3 = inlined_call_operand.vmem [shape: f32[256,3], index: 3, kind: input, shape index: {}]
  %s4 = inlined_call_operand.vmem [shape: f32[8,2], index: 4, kind: output, shape index: {}]
  %s5 = sld [smem:[#allocation0]]
  $region26: #{ldmk_detector_forward.1} parent=0
    _
  %s7 = ssub.s32 1, %s5
  %s8 = scalar_select 0, %s7, %s5
  // Predicated region
  $region2: #{ldmk_detector_forward.1} parent=0 // pred_check
    _
  $region3: #{ldmk_detector_forward.1} parent=0 // pred_check_branch
    %10 = sbr.rel (0) target = $region5
  $region4: #{ldmk_detector_forward.1} parent=0 // pred_region
    _
  $region5: #{ldmk_detector_forward.1} parent=0 // pred_fallthru
    _
  // Predicated region
  $region6: #{ldmk_detector_forward.1} parent=0 // pred_check
    _
  $region7: #{ldmk_detector_forward.1} parent=0 // pred_check_branch
    %12 = sbr.rel (0) target = $region9
  $region8: #{ldmk_detector_forward.1} parent=0 // pred_region
    _
  $region9: #{ldmk_detector_forward.1} parent=0 // pred_fallthru
    _
  // Predicated region
  $region10: #{ldmk_detector_forward.1} parent=0 // pred_check
    _
  $region11: #{ldmk_detector_forward.1} parent=0 // pred_check_branch
    %14 = sbr.rel (0) target = $region13
  $region12: #{ldmk_detector_forward.1} parent=0 // pred_region
    _
  $region13: #{ldmk_detector_forward.1} parent=0 // pred_fallthru
    _
  // Predicated region
  $region14: #{ldmk_detector_forward.1} parent=0 // pred_check
    _
  $region15: #{ldmk_detector_forward.1} parent=0 // pred_check_branch
    %16 = sbr.rel (0) target = $region17
  $region16: #{ldmk_detector_forward.1} parent=0 // pred_region
    _
  $region17: #{ldmk_detector_forward.1} parent=0 // pred_fallthru
    _
  %v17 = vld [vmem:[%s1] sm:$0xff]
  %v18 = vld [vmem:[%s0] sm:$0xff]
  %v19 = vld [vmem:[%s0 + $0x8] sm:$0xff]
  %v20 = vld [vmem:[%s0 + $0x10] sm:$0xff]
  %v21 = vld [vmem:[%s0 + $0x18] sm:$0xff]
  %v22 = vld [vmem:[%s0 + $0x20] sm:$0xff]
  %v23 = vld [vmem:[%s0 + $0x28] sm:$0xff]
  %v24 = vld [vmem:[%s0 + $0x30] sm:$0xf]
  %v25 = vld [vmem:[%s0 + $0x38] sm:$0xf]
  %vm26 = vcmask 228352
  %v28 = vsel %vm26, %v17, 0
  %vm30 = vcmask 1043456
  %v32 = vsel %vm30, %v24, 0
  %v35 = vsel %vm30, %v25, 0
  %37 = vmatpush.msra.mxu0 0.0
  %38 = vmatpush.msra.mxu0 0.0
  %39 = vmatpush.msra.mxu0 0.0
  %40 = vmatpush.msra.mxu0 0.0
  %41 = vmatpush.msra.mxu0 0.0
  %42 = vmatpush.msra.mxu0 0.0
  %43 = vmatpush.msra.mxu0 0.0
  %44 = vmatpush.msra.mxu0 0.0
  %45 = vmatpush.msra.mxu0 0.0
  %46 = vmatpush.msra.mxu0 0.0
  %47 = vmatpush.msra.mxu0 0.0
  %48 = vmatpush.msra.mxu0 0.0
  %49 = vmatpush.msra.mxu0 %v32
  %50 = vmatpush.msra.mxu0 %v22
  %51 = vmatpush.msra.mxu0 %v20
  %52 = vmatpush.msra.mxu0 %v18
  %53 = vmatmul.f32.gmra.mxu0 %v28
  %v54 = vpop.f32.mrf.mxu0
  %v55 = vadd.f32 0.0, %v54
  %56 = vdwg.mxu0
  %57 = vmatpush.msra.mxu0 0.0
  %58 = vmatpush.msra.mxu0 0.0
  %59 = vmatpush.msra.mxu0 0.0
  %60 = vmatpush.msra.mxu0 0.0
  %61 = vmatpush.msra.mxu0 0.0
  %62 = vmatpush.msra.mxu0 0.0
  %63 = vmatpush.msra.mxu0 0.0
  %64 = vmatpush.msra.mxu0 0.0
  %65 = vmatpush.msra.mxu0 0.0
  %66 = vmatpush.msra.mxu0 0.0
  %67 = vmatpush.msra.mxu0 0.0
  %68 = vmatpush.msra.mxu0 0.0
  %69 = vmatpush.msra.mxu0 %v35
  %70 = vmatpush.msra.mxu0 %v23
  %71 = vmatpush.msra.mxu0 %v21
  %72 = vmatpush.msra.mxu0 %v19
  %73 = vmatmul.f32.gmra.mxu0 %v28
  %v74 = vpop.f32.mrf.mxu0
  %v75 = vadd.f32 0.0, %v74
  %76 = vdwg.mxu0
  %v77 = vmax.f32 %v55, 0.0
  %v78 = vmax.f32 %v75, 0.0
  %v79 = vld [vmem:[%s2] sm:$0xff]
  %vm80 = vcmask 64512
  %v82 = vsel %vm80, %v79, 0
  %84 = vmatpush.msra.mxu0 0.0
  %85 = vmatpush.msra.mxu0 0.0
  %86 = vmatpush.msra.mxu0 0.0
  %87 = vmatpush.msra.mxu0 0.0
  %88 = vmatpush.msra.mxu0 0.0
  %89 = vmatpush.msra.mxu0 0.0
  %90 = vmatpush.msra.mxu0 0.0
  %91 = vmatpush.msra.mxu0 0.0
  %92 = vmatpush.msra.mxu0 0.0
  %93 = vmatpush.msra.mxu0 0.0
  %94 = vmatpush.msra.mxu0 0.0
  %95 = vmatpush.msra.mxu0 0.0
  %96 = vmatpush.msra.mxu0 0.0
  %97 = vmatpush.msra.mxu0 0.0
  %98 = vmatpush.msra.mxu0 0.0
  %99 = vmatpush.msra.mxu0 %v77
  %100 = vmatmul.f32.gmra.mxu0 %v82
  %v101 = vpop.f32.mrf.mxu0
  %v102 = vadd.f32 0.0, %v101
  %103 = vdwg.mxu0
  %104 = vmatpush.msra.mxu0 0.0
  %105 = vmatpush.msra.mxu0 0.0
  %106 = vmatpush.msra.mxu0 0.0
  %107 = vmatpush.msra.mxu0 0.0
  %108 = vmatpush.msra.mxu0 0.0
  %109 = vmatpush.msra.mxu0 0.0
  %110 = vmatpush.msra.mxu0 0.0
  %111 = vmatpush.msra.mxu0 0.0
  %112 = vmatpush.msra.mxu0 0.0
  %113 = vmatpush.msra.mxu0 0.0
  %114 = vmatpush.msra.mxu0 0.0
  %115 = vmatpush.msra.mxu0 0.0
  %116 = vmatpush.msra.mxu0 0.0
  %117 = vmatpush.msra.mxu0 0.0
  %118 = vmatpush.msra.mxu0 0.0
  %119 = vmatpush.msra.mxu0 %v78
  %120 = vmatmul.f32.gmra.mxu0 %v82
  %v121 = vpop.f32.mrf.mxu0
  %v122 = vadd.f32 0.0, %v121
  %123 = vdwg.mxu0
  %v124 = vmax.f32 %v102, %v122
  %125 = vmax.xlane.f32.xlu0 %v124
  %v126 = vpop.xlane.xlu0 %125
  %v127 = vsub.f32 %v102, %v126
  %v128 = vsub.f32 %v122, %v126
  %v129 = vmul.f32 %v127, 1.442695
  %v130 = vpow.pop %v129
  %v131 = vmul.f32 %v128, 1.442695
  %v132 = vpow.pop %v131
  %v133 = vld [vmem:[%s3] sm:$0xff]
  %v134 = vld [vmem:[%s3 + $0x8] sm:$0xff]
  %v135 = vld [vmem:[%s3 + $0x10] sm:$0xff]
  %v136 = vld [vmem:[%s3 + $0x18] sm:$0xff]
  %v137 = vld [vmem:[%s3 + $0x20] sm:$0xff]
  %v138 = vld [vmem:[%s3 + $0x28] sm:$0xff]
  %v139 = vld [vmem:[%s3 + $0x30] sm:$0xff]
  %v140 = vld [vmem:[%s3 + $0x38] sm:$0xff]
  %v141 = vld [vmem:[%s3 + $0x40] sm:$0xff]
  %v142 = vld [vmem:[%s3 + $0x48] sm:$0xff]
  %v143 = vld [vmem:[%s3 + $0x50] sm:$0xff]
  %v144 = vld [vmem:[%s3 + $0x58] sm:$0xff]
  %v145 = vld [vmem:[%s3 + $0x60] sm:$0xff]
  %v146 = vld [vmem:[%s3 + $0x68] sm:$0xff]
  %v147 = vld [vmem:[%s3 + $0x70] sm:$0xff]
  %v148 = vld [vmem:[%s3 + $0x78] sm:$0xff]
  %v149 = vld [vmem:[%s3 + $0x80] sm:$0xff]
  %v150 = vld [vmem:[%s3 + $0x88] sm:$0xff]
  %v151 = vld [vmem:[%s3 + $0x90] sm:$0xff]
  %v152 = vld [vmem:[%s3 + $0x98] sm:$0xff]
  %v153 = vld [vmem:[%s3 + $0xa0] sm:$0xff]
  %v154 = vld [vmem:[%s3 + $0xa8] sm:$0xff]
  %v155 = vld [vmem:[%s3 + $0xb0] sm:$0xff]
  %v156 = vld [vmem:[%s3 + $0xb8] sm:$0xff]
  %v157 = vld [vmem:[%s3 + $0xc0] sm:$0xff]
  %v158 = vld [vmem:[%s3 + $0xc8] sm:$0xff]
  %v159 = vld [vmem:[%s3 + $0xd0] sm:$0xff]
  %v160 = vld [vmem:[%s3 + $0xd8] sm:$0xff]
  %v161 = vld [vmem:[%s3 + $0xe0] sm:$0xff]
  %v162 = vld [vmem:[%s3 + $0xe8] sm:$0xff]
  %v163 = vld [vmem:[%s3 + $0xf0] sm:$0xff]
  %v164 = vld [vmem:[%s3 + $0xf8] sm:$0xff]
  %165 = vmatpush.msra.mxu0 %v148
  %166 = vmatpush.msra.mxu0 %v147
  %167 = vmatpush.msra.mxu0 %v146
  %168 = vmatpush.msra.mxu0 %v145
  %169 = vmatpush.msra.mxu0 %v144
  %170 = vmatpush.msra.mxu0 %v143
  %171 = vmatpush.msra.mxu0 %v142
  %172 = vmatpush.msra.mxu0 %v141
  %173 = vmatpush.msra.mxu0 %v140
  %174 = vmatpush.msra.mxu0 %v139
  %175 = vmatpush.msra.mxu0 %v138
  %176 = vmatpush.msra.mxu0 %v137
  %177 = vmatpush.msra.mxu0 %v136
  %178 = vmatpush.msra.mxu0 %v135
  %179 = vmatpush.msra.mxu0 %v134
  %180 = vmatpush.msra.mxu0 %v133
  %181 = vmatmul.f32.gmra.mxu0 %v130
  %v182 = vpop.f32.mrf.mxu0
  %v183 = vadd.f32 0.0, %v182
  %184 = vdwg.mxu0
  %185 = vmatpush.msra.mxu0 %v164
  %186 = vmatpush.msra.mxu0 %v163
  %187 = vmatpush.msra.mxu0 %v162
  %188 = vmatpush.msra.mxu0 %v161
  %189 = vmatpush.msra.mxu0 %v160
  %190 = vmatpush.msra.mxu0 %v159
  %191 = vmatpush.msra.mxu0 %v158
  %192 = vmatpush.msra.mxu0 %v157
  %193 = vmatpush.msra.mxu0 %v156
  %194 = vmatpush.msra.mxu0 %v155
  %195 = vmatpush.msra.mxu0 %v154
  %196 = vmatpush.msra.mxu0 %v153
  %197 = vmatpush.msra.mxu0 %v152
  %198 = vmatpush.msra.mxu0 %v151
  %199 = vmatpush.msra.mxu0 %v150
  %200 = vmatpush.msra.mxu0 %v149
  %201 = vmatmul.f32.gmra.mxu0 %v132
  %v202 = vpop.f32.mrf.mxu0
  %v203 = vadd.f32 %v183, %v202
  %204 = vdwg.mxu0
  %v205 = vrcp.pop %v203
  %207 = vset.pattern.permute.xlu0 0
  %208 = vperm.xlu0 %207, %v205
  %v209 = vpop.permute.xlu0 %208
  %v211 = vmul.f32 %v203, %v209
  %213 = vrot.lane.b32.xlu0 %v211, 127
  %v214 = vpop.permute.xlu0 %213
  %vm216 = vcmask 15360
  %217 = vst.msk [vmem:[%s4] sm:$0xff] %vm216, %v214
  // Predicated region
  $region18: #{ldmk_detector_forward.1} parent=0 // pred_check
    _
  $region19: #{ldmk_detector_forward.1} parent=0 // pred_check_branch
    %219 = sbr.rel (0) target = $region21
  $region20: #{ldmk_detector_forward.1} parent=0 // pred_region
    _
  $region21: #{ldmk_detector_forward.1} parent=0 // pred_fallthru
    _
  // Predicated region
  $region22: #{ldmk_detector_forward.1} parent=0 // pred_check
    _
  $region23: #{ldmk_detector_forward.1} parent=0 // pred_check_branch
    %221 = sbr.rel (0) target = $region25
  $region24: #{ldmk_detector_forward.1} parent=0 // pred_region
    _
  $region25: #{ldmk_detector_forward.1} parent=0 // pred_fallthru
    _

</llo_original>
